<compile_context>
chip_gen: v7x
topology: tpu7x:2x2x1
jax: 0.10.0
libtpu: 0.0.40
codegen_flags: <defaults>
</compile_context>

<pallas_src>
import functools

import numpy as np
import jax
import jax.numpy as jnp
from jax.experimental import pallas as pl
from jax.experimental.pallas import tpu as pltpu

LANE = 128


def _round_up(n, m):
    return ((n + m - 1) // m) * m


def _pad2d(a, rows, cols):
    return jnp.pad(a, ((0, rows - a.shape[0]), (0, cols - a.shape[1])))


# ----------------------------- Pallas kernel --------------------------------

def _gat_layer_kernel(x_ref, w_ref, a_dst_ref, a_src_ref, bias_ref, score_ref,
                      out_ref, *, apply_relu):
    # Linear transform of ALL source-node features (MXU). x/W index_maps are
    # constant across the grid so they stay VMEM-resident; the recompute per dst
    # tile is cheap relative to the O(N^2) softmax path at these sizes.
    h = jnp.dot(x_ref[...], w_ref[...], preferred_element_type=jnp.float32)   # [N, Cp]

    # Attention logits for this destination tile. The non-edge -1e30 bias is
    # pre-folded into score, so no adjacency mask / selects are needed here.
    e = a_dst_ref[...] + a_src_ref[...] + score_ref[...]                      # [T, N]
    e = jnp.where(e > 0, e, 0.2 * e)                                          # LeakyReLU(0.2)

    # Row softmax. Self-loops guarantee a finite row max, so exp() of masked
    # entries underflows to exactly 0 — no second select required.
    m = jnp.max(e, axis=-1, keepdims=True)
    p = jnp.exp(e - m)
    alpha = p * pl.reciprocal(jnp.sum(p, axis=-1, keepdims=True), approx=True)

    # Neighbourhood aggregation (MXU) + bias, with the inter-layer ReLU fused.
    out = jnp.dot(alpha, h, preferred_element_type=jnp.float32) + bias_ref[...]
    if apply_relu:
        out = jnp.maximum(out, 0.0)
    out_ref[...] = out


def gat_layer(x, w, a_dst, a_src, bias, score, *, apply_relu, tile_dst=None):
    """One GATConv layer. x:[N,Fp], w:[Fp,Cp], a_dst:[N,1], a_src:[1,N],
    bias:[1,Cp], score:[N,N] (mask already folded in). Returns [N,Cp]."""
    N, fp = x.shape
    cp = w.shape[1]
    if tile_dst is None:
        tile_dst = min(256, _round_up(N, 8))
    grid = (pl.cdiv(N, tile_dst),)

    kernel = functools.partial(_gat_layer_kernel, apply_relu=apply_relu)
    return pl.pallas_call(
        kernel,
        out_shape=jax.ShapeDtypeStruct((N, cp), jnp.float32),
        grid=grid,
        in_specs=[
            pl.BlockSpec((N, fp), lambda i: (0, 0)),          # x   (all sources)
            pl.BlockSpec((fp, cp), lambda i: (0, 0)),         # W
            pl.BlockSpec((tile_dst, 1), lambda i: (i, 0)),    # a_dst (this dst tile)
            pl.BlockSpec((1, N), lambda i: (0, 0)),           # a_src (all sources)
            pl.BlockSpec((1, cp), lambda i: (0, 0)),          # bias
            pl.BlockSpec((tile_dst, N), lambda i: (i, 0)),    # masked score tile
        ],
        out_specs=pl.BlockSpec((tile_dst, cp), lambda i: (i, 0)),
        compiler_params=pltpu.CompilerParams(
            dimension_semantics=("parallel",),
            vmem_limit_bytes=48 * 1024 * 1024,
        ),
    )(x, w, a_dst, a_src, bias, score)


# ------------------------------ JAX glue -------------------------------------

def dense_edge_inputs(edge_index, edge_attr, num_nodes):
    """Dense adjacency (with self-loops) + PyG-style 'mean' self-loop edge attrs."""
    src, dst = edge_index[0], edge_index[1]
    valid = (src != dst)                                  # remove_self_loops

    adj = jnp.zeros((num_nodes, num_nodes), jnp.float32)
    adj = adj.at[dst, src].max(valid.astype(jnp.float32))
    diag = jnp.arange(num_nodes)
    adj = adj.at[diag, diag].set(1.0)                     # add_self_loops

    w = valid.astype(jnp.float32)[:, None]
    sum_attr = jnp.zeros((num_nodes, edge_attr.shape[1]), jnp.float32).at[dst].add(edge_attr * w)
    cnt = jnp.zeros((num_nodes, 1), jnp.float32).at[dst].add(w)
    loop_attr = sum_attr / jnp.maximum(cnt, 1.0)          # fill_value='mean' (0 if no in-edges)
    return adj, loop_attr, valid


def dense_edge_score(edge_index, edge_attr, loop_attr, valid, num_nodes,
                     w_edge, att_edge):
    """Per-edge scalar (lin_edge(e_attr) . att_edge) scattered into dense [N_dst, N_src].
    Note: .add double-counts duplicate non-self-loop edges; inputs here have none."""
    v = w_edge.T @ att_edge                               # [edge_dim]
    e_scalar = edge_attr @ v                              # [E]
    loop_scalar = loop_attr @ v                           # [N]
    src, dst = edge_index[0], edge_index[1]
    score = jnp.zeros((num_nodes, num_nodes), jnp.float32)
    score = score.at[dst, src].add(jnp.where(valid, e_scalar, 0.0))
    diag = jnp.arange(num_nodes)
    score = score.at[diag, diag].set(loop_scalar)
    return score


def init_gat_params(key, fin, c, edge_dim):
    ks = jax.random.split(key, 6)
    scale = 1.0 / np.sqrt(fin)
    return dict(
        w=jax.random.normal(ks[0], (fin, c), jnp.float32) * scale,    # lin weight^T
        att_src=jax.random.normal(ks[1], (1, c), jnp.float32) * 0.1,
        att_dst=jax.random.normal(ks[2], (1, c), jnp.float32) * 0.1,
        att_edge=jax.random.normal(ks[3], (c,), jnp.float32) * 0.1,
        w_edge=jax.random.normal(ks[4], (c, edge_dim), jnp.float32) * 0.5,
        bias=jax.random.normal(ks[5], (1, c), jnp.float32) * 0.1,
    )


def gnn_forward(x, edge_index, edge_attr, params_list, *, tile_dst=None):
    """Equivalent of GNN.forward: GATConv layers with ReLU in between (eval mode)."""
    N = x.shape[0]
    adj, loop_attr, valid = dense_edge_inputs(edge_index, edge_attr, N)
    # Fold the non-edge mask into the additive score once per graph: removes the
    # dense adjacency input and both selects from the kernel's softmax path.
    mask_bias = jnp.where(adj > 0, 0.0, -1e30).astype(jnp.float32)

    f_true = x.shape[1]
    h = _pad2d(x, N, _round_up(f_true, LANE))             # lane-dense features [N, Fp]
    for i, p in enumerate(params_list):
        c_true = p['w'].shape[1]
        fp, cp = h.shape[1], _round_up(c_true, LANE)

        # Zero-padding of params keeps the math exact (padded lanes stay zero).
        w_p = _pad2d(p['w'], fp, cp)                      # [Fp, Cp]
        bias_p = _pad2d(p['bias'], 1, cp)                 # [1, Cp]
        att_src_col = _pad2d(p['att_src'].T, cp, 1)       # [Cp, 1]
        att_dst_col = _pad2d(p['att_dst'].T, cp, 1)       # [Cp, 1]

        # Dense per-edge score with the -1e30 non-edge bias folded in.
        score = dense_edge_score(edge_index, edge_attr, loop_attr, valid, N,
                                 p['w_edge'], p['att_edge']) + mask_bias

        # Thin O(N*C) attention-logit matvecs computed in the wrapper: avoids
        # in-kernel cross-lane reductions and the [N,1]->[1,N] XLU transpose.
        a_dst_col = h @ (w_p @ att_dst_col)               # [N, 1]
        a_src_row = (h @ (w_p @ att_src_col)).T           # [1, N]

        h = gat_layer(h, w_p, a_dst_col, a_src_row, bias_p, score,
                      apply_relu=(i < len(params_list) - 1), tile_dst=tile_dst)
        f_true = c_true
    return h[:, :f_true]


# Pure-JAX reference of the same dense GAT math (correctness check only).
def _gat_layer_ref(x, p, adj, score):
    h = x @ p['w']
    a_src = (h * p['att_src']).sum(-1, keepdims=True)
    a_dst = (h * p['att_dst']).sum(-1, keepdims=True)
    e = a_dst + a_src.T + score
    e = jnp.where(e > 0, e, 0.2 * e)
    e = jnp.where(adj > 0, e, -1e30)
    a = jax.nn.softmax(e, axis=-1)
    a = jnp.where(adj > 0, a, 0.0)
    a = a / a.sum(-1, keepdims=True)
    return a @ h + p['bias']


# ------------------------------- main ----------------------------------------

if __name__ == "__main__":
    key = jax.random.PRNGKey(0)
    N, IN_C, HID_C, OUT_C, EDGE_DIM = 16, 4, 32, 8, 1
    NUM_LAYERS = 2

    k_x, k_e, k_p1, k_p2 = jax.random.split(key, 4)
    x = jax.random.normal(k_x, (N, IN_C), jnp.float32)

    # Bidirectional ring graph (no self-loops, no duplicate edges).
    idx = np.arange(N)
    src = np.concatenate([idx, (idx + 1) % N]).astype(np.int32)
    dst = np.concatenate([(idx + 1) % N, idx]).astype(np.int32)
    edge_index = jnp.asarray(np.stack([src, dst]))                  # [2, E], E = 32
    edge_attr = jax.random.normal(k_e, (edge_index.shape[1], EDGE_DIM), jnp.float32)

    params = [init_gat_params(k_p1, IN_C, HID_C, EDGE_DIM),
              init_gat_params(k_p2, HID_C, OUT_C, EDGE_DIM)]
    assert len(params) == NUM_LAYERS

    # tile_dst=8 -> 2-step grid over destination-row tiles (exercises the pipeline).
    out = gnn_forward(x, edge_index, edge_attr, params, tile_dst=8)
    out = jax.block_until_ready(out)
    assert out.shape == (N, OUT_C) and out.dtype == jnp.float32

    # Correctness check against the pure-JAX dense reference (tolerance accounts
    # for the EUP approximate reciprocal in the kernel's softmax).
    adj, loop_attr, valid = dense_edge_inputs(edge_index, edge_attr, N)
    h_ref = x
    for i, p in enumerate(params):
        score = dense_edge_score(edge_index, edge_attr, loop_attr, valid, N,
                                 p['w_edge'], p['att_edge'])
        h_ref = _gat_layer_ref(h_ref, p, adj, score)
        if i < len(params) - 1:
            h_ref = jax.nn.relu(h_ref)
    np.testing.assert_allclose(np.asarray(out), np.asarray(h_ref), atol=5e-3, rtol=5e-3)

    print("KERNEL_OK")
</pallas_src>

<mosaic_0001>
module attributes {stable_mosaic.version = 11 : i64} {
  func.func @_gat_layer_kernel(%arg0: i32, %arg1: memref<16x128xf32, #tpu.memory_space<vmem>>, %arg2: memref<128x128xf32, #tpu.memory_space<vmem>>, %arg3: memref<8x1xf32, #tpu.memory_space<vmem>>, %arg4: memref<1x16xf32, #tpu.memory_space<vmem>>, %arg5: memref<1x128xf32, #tpu.memory_space<vmem>>, %arg6: memref<8x16xf32, #tpu.memory_space<vmem>>, %arg7: memref<8x128xf32, #tpu.memory_space<vmem>>) attributes {dimension_semantics = [#tpu.dimension_semantics<parallel>], iteration_bounds = array<i64: 2>, scalar_prefetch = 0 : i64, scratch_operands = 0 : i64, tpu.core_type = #tpu.core_type<tc>, window_params = [{pipeline_mode = #tpu.pipeline_mode<synchronous>, transform_indices = @transform_0, window_bounds = array<i64: 16, 128>}, {pipeline_mode = #tpu.pipeline_mode<synchronous>, transform_indices = @transform_1, window_bounds = array<i64: 128, 128>}, {transform_indices = @transform_2, window_bounds = array<i64: 8, 1>}, {pipeline_mode = #tpu.pipeline_mode<synchronous>, transform_indices = @transform_3, window_bounds = array<i64: 1, 16>}, {pipeline_mode = #tpu.pipeline_mode<synchronous>, transform_indices = @transform_4, window_bounds = array<i64: 1, 128>}, {transform_indices = @transform_5, window_bounds = array<i64: 8, 16>}, {transform_indices = @transform_6, window_bounds = array<i64: 8, 128>}]} {
    %c0 = arith.constant 0 : index
    %c0_0 = arith.constant 0 : index
    %0 = vector.load %arg1[%c0, %c0_0] : memref<16x128xf32, #tpu.memory_space<vmem>>, vector<16x128xf32>
    %c0_1 = arith.constant 0 : index
    %c0_2 = arith.constant 0 : index
    %1 = vector.load %arg2[%c0_1, %c0_2] : memref<128x128xf32, #tpu.memory_space<vmem>>, vector<128x128xf32>
    %cst = arith.constant dense<0.000000e+00> : vector<16x128xf32>
    %2 = tpu.matmul %0, %1, %cst {dimension_numbers = #tpu.dot_dimension_numbers<[1], [0], [0], [1], [0, 0, 1, 1], [], []>} : vector<16x128xf32>, vector<128x128xf32>, vector<16x128xf32> -> vector<16x128xf32>
    %c0_3 = arith.constant 0 : index
    %c0_4 = arith.constant 0 : index
    %3 = vector.load %arg3[%c0_3, %c0_4] : memref<8x1xf32, #tpu.memory_space<vmem>>, vector<8x1xf32>
    %c0_5 = arith.constant 0 : index
    %c0_6 = arith.constant 0 : index
    %4 = vector.load %arg4[%c0_5, %c0_6] : memref<1x16xf32, #tpu.memory_space<vmem>>, vector<1x16xf32>
    %5 = vector.broadcast %3 : vector<8x1xf32> to vector<8x16xf32>
    %6 = vector.broadcast %4 : vector<1x16xf32> to vector<8x16xf32>
    %7 = arith.addf %5, %6 : vector<8x16xf32>
    %c0_7 = arith.constant 0 : index
    %c0_8 = arith.constant 0 : index
    %8 = vector.load %arg6[%c0_7, %c0_8] : memref<8x16xf32, #tpu.memory_space<vmem>>, vector<8x16xf32>
    %9 = arith.addf %7, %8 : vector<8x16xf32>
    %cst_9 = arith.constant 0.000000e+00 : f32
    %10 = vector.broadcast %cst_9 : f32 to vector<8x16xf32>
    %11 = arith.cmpf ogt, %9, %10 : vector<8x16xf32>
    %cst_10 = arith.constant 2.000000e-01 : f32
    %12 = vector.broadcast %cst_10 : f32 to vector<8x16xf32>
    %13 = arith.mulf %12, %9 : vector<8x16xf32>
    %14 = arith.select %11, %9, %13 : vector<8x16xi1>, vector<8x16xf32>
    %cst_11 = arith.constant dense<0xFF800000> : vector<8xf32>
    %15 = vector.multi_reduction <maximumf>, %14, %cst_11 [1] : vector<8x16xf32> to vector<8xf32>
    %16 = vector.shape_cast %15 : vector<8xf32> to vector<8x1xf32>
    %17 = vector.broadcast %16 : vector<8x1xf32> to vector<8x16xf32>
    %18 = arith.subf %14, %17 : vector<8x16xf32>
    %19 = math.exp %18 : vector<8x16xf32>
    %cst_12 = arith.constant dense<0.000000e+00> : vector<8xf32>
    %20 = vector.multi_reduction <add>, %19, %cst_12 [1] : vector<8x16xf32> to vector<8xf32>
    %21 = vector.shape_cast %20 : vector<8xf32> to vector<8x1xf32>
    %22 = tpu.reciprocal %21 {approx = true} : vector<8x1xf32> -> vector<8x1xf32>
    %23 = vector.broadcast %22 : vector<8x1xf32> to vector<8x16xf32>
    %24 = arith.mulf %19, %23 : vector<8x16xf32>
    %cst_13 = arith.constant dense<0.000000e+00> : vector<8x128xf32>
    %25 = tpu.matmul %24, %2, %cst_13 {dimension_numbers = #tpu.dot_dimension_numbers<[1], [0], [0], [1], [0, 0, 1, 1], [], []>} : vector<8x16xf32>, vector<16x128xf32>, vector<8x128xf32> -> vector<8x128xf32>
    %c0_14 = arith.constant 0 : index
    %c0_15 = arith.constant 0 : index
    %26 = vector.load %arg5[%c0_14, %c0_15] : memref<1x128xf32, #tpu.memory_space<vmem>>, vector<1x128xf32>
    %27 = vector.broadcast %26 : vector<1x128xf32> to vector<8x128xf32>
    %28 = arith.addf %25, %27 : vector<8x128xf32>
    %cst_16 = arith.constant 0.000000e+00 : f32
    %29 = vector.broadcast %cst_16 : f32 to vector<8x128xf32>
    %30 = arith.maximumf %28, %29 : vector<8x128xf32>
    %c0_17 = arith.constant 0 : index
    %c0_18 = arith.constant 0 : index
    %31 = vector.load %arg7[%c0_17, %c0_18] : memref<8x128xf32, #tpu.memory_space<vmem>>, vector<8x128xf32>
    tpu.vector_store %arg7[%c0_17, %c0_18], %30 {strides = array<i32>} : memref<8x128xf32, #tpu.memory_space<vmem>>, vector<8x128xf32>,
    return
  }
  func.func @transform_0(%arg0: i32) -> (i32, i32) {
    %c0_i32 = arith.constant 0 : i32
    %c0_i32_0 = arith.constant 0 : i32
    %c0_i32_1 = arith.constant 0 : i32
    return %c0_i32, %c0_i32_0 : i32, i32
  }
  func.func @transform_1(%arg0: i32) -> (i32, i32) {
    %c0_i32 = arith.constant 0 : i32
    %c0_i32_0 = arith.constant 0 : i32
    %c0_i32_1 = arith.constant 0 : i32
    return %c0_i32, %c0_i32_0 : i32, i32
  }
  func.func @transform_2(%arg0: i32) -> (i32, i32) {
    %c0_i32 = arith.constant 0 : i32
    %c0_i32_0 = arith.constant 0 : i32
    return %arg0, %c0_i32 : i32, i32
  }
  func.func @transform_3(%arg0: i32) -> (i32, i32) {
    %c0_i32 = arith.constant 0 : i32
    %c0_i32_0 = arith.constant 0 : i32
    %c0_i32_1 = arith.constant 0 : i32
    return %c0_i32, %c0_i32_0 : i32, i32
  }
  func.func @transform_4(%arg0: i32) -> (i32, i32) {
    %c0_i32 = arith.constant 0 : i32
    %c0_i32_0 = arith.constant 0 : i32
    %c0_i32_1 = arith.constant 0 : i32
    return %c0_i32, %c0_i32_0 : i32, i32
  }
  func.func @transform_5(%arg0: i32) -> (i32, i32) {
    %c0_i32 = arith.constant 0 : i32
    %c0_i32_0 = arith.constant 0 : i32
    return %arg0, %c0_i32 : i32, i32
  }
  func.func @transform_6(%arg0: i32) -> (i32, i32) {
    %c0_i32 = arith.constant 0 : i32
    %c0_i32_0 = arith.constant 0 : i32
    return %arg0, %c0_i32 : i32, i32
  }
}

</mosaic_0001>

<llo_original>
// kernel: tpu_custom_call.1
$region0: #{tpu_custom_call.1}
  #allocation0 [shape = 'u32[]', space=smem, size = 0x4, offset = 0x4, fixed_abs, tag = 'smem constant byte address 0x4 - core index']
  #allocation1 [shape = 'u32[144,128]{1,0:T(1,128)}', space=vmem, size = 0x12000, scoped, tag = 'internal scratch']
  %s0 = inlined_call_operand.vmem [shape: f32[16,128], index: 0, kind: input, shape index: {}]
  %s1 = inlined_call_operand.hbm [shape: f32[128,128], index: 1, kind: input, shape index: {}]
  %s2 = inlined_call_operand.vmem [shape: f32[16,1], index: 2, kind: input, shape index: {}]
  %s3 = inlined_call_operand.hbm [shape: f32[1,16], index: 3, kind: input, shape index: {}]
  %s4 = inlined_call_operand.hbm [shape: f32[1,128], index: 4, kind: input, shape index: {}]
  %s5 = inlined_call_operand.vmem [shape: f32[16,16], index: 5, kind: input, shape index: {}]
  %s6 = inlined_call_operand.hbm [shape: f32[16,128], index: 6, kind: output, shape index: {}]
  %s7 = sld [smem:[#allocation0]]
  $region69: #{tpu_custom_call.1} parent=0
    _
  %s9 = ssub.s32 1, %s7
  %s10 = scalar_select 0, %s9, %s7
  $region1: #{tpu_custom_call.1} parent=0
    #allocation2 [shape = 'u8[65536]{0}', space=vmem, size = 0x10000, scoped, tag = 'input window, operand 1, single buffered']
    #allocation3 [shape = 's32[2]{0}', space=sflag, size = 0x8, scoped, tag = 'scoped memory for tpu_custom_call.1']
    #allocation4 [shape = 's32[2]{0}', space=sflag, size = 0x8, scoped, tag = 'scoped memory for tpu_custom_call.1']
    #allocation5 [shape = 'u8[512]{0}', space=vmem, size = 0x400, scoped, tag = 'input window, operand 3, single buffered']
    #allocation6 [shape = 's32[1]{0}', space=sflag, size = 0x4, scoped, tag = 'scoped memory for tpu_custom_call.1']
    #allocation7 [shape = 'u8[512]{0}', space=vmem, size = 0x400, scoped, tag = 'input window, operand 4, single buffered']
    #allocation8 [shape = 'u8[8192]{0}', space=vmem, size = 0x2000, scoped, tag = 'output window, operand 0']
    %11 = vsyncpa [#allocation3], 0
    %12 = vsyncpa [#allocation6], 0
    %13 = vsyncpa [#allocation4], 0
    %s14 = scalar_lea.sflag [#allocation4], 1
    %15 = vsyncpa %s14, 0
    loop: start=0, step=1, limit=4
    $region2: #{tpu_custom_call.1} parent=1 // loop_pre_header
      _
    $region3: #{tpu_custom_call.1} parent=1 // loop_header
      %s17 = sphi 0, %s21
      %p18 = scmp.ge.s32.totalorder %s17, 4
      %s25 = sphi 0, %s25
      %s27 = sphi 0, %s25
      %s28 = sphi 0, %s27
      %s42 = sphi 0, %s28
      %s46 = sphi 0, %s46
      %s48 = sphi 0, %s46
      %s49 = sphi 0, %s48
      %s63 = sphi 0, %s49
      %s69 = sphi 0, %s71
      %s72 = sphi 0, %s69
      %s73 = sphi 0, %s72
      %s89 = sphi 0, %s73
      %s93 = sphi 0, %s93
      %s95 = sphi 0, %s93
      %s96 = sphi 0, %s95
      %s110 = sphi 0, %s96
      %s114 = sphi 0, %s114
      %s116 = sphi 0, %s114
      %s117 = sphi 0, %s116
      %s131 = sphi 0, %s117
      %s137 = sphi 0, %s139
      %s140 = sphi 0, %s137
      %s141 = sphi 0, %s140
      %s157 = sphi 0, %s141
      %s163 = sphi 0, %s165
      %s166 = sphi 0, %s163
      %s167 = sphi 0, %s166
      %s183 = sphi 0, %s167
    $region4: #{tpu_custom_call.1} parent=1 // loop_header_branch
      %20 = sbr.rel (%p18) target = $region8
    $region5: #{tpu_custom_call.1} parent=1 // loop_body
      %s22 = ssub.s32 %s17, 1
      %s23 = ssub.s32 %s17, 2
      %s24 = sadd.s32 %s17, 1
      %s26 = sadd.s32 %s25, 1
      %p29 = scmp.eq.s32.totalorder %s17, 1
      %p30 = scmp.ne.s32.totalorder %s25, %s27
      %p31 = scmp.eq.s32.totalorder %s17, 0
      %p32 = por %p30, %p31
      %p33 = scmp.ne.s32.totalorder %s25, %s27
      %p34 = scmp.eq.s32.totalorder %s22, 1
      %p35 = por %p33, %p34
      %p36 = scmp.ne.s32.totalorder %s27, %s28
      %p37 = scmp.eq.s32.totalorder %s22, 0
      %p38 = por %p36, %p37
      %p39 = scmp.ne.s32.totalorder %s27, %s28
      %p40 = scmp.eq.s32.totalorder %s23, 1
      %p41 = por %p39, %p40
      %p43 = scmp.ne.s32.totalorder %s28, %s42
      %p44 = scmp.eq.s32.totalorder %s23, 0
      %p45 = por %p43, %p44
      %s47 = sadd.s32 %s46, 1
      %p50 = scmp.eq.s32.totalorder %s17, 1
      %p51 = scmp.ne.s32.totalorder %s46, %s48
      %p52 = scmp.eq.s32.totalorder %s17, 0
      %p53 = por %p51, %p52
      %p54 = scmp.ne.s32.totalorder %s46, %s48
      %p55 = scmp.eq.s32.totalorder %s22, 1
      %p56 = por %p54, %p55
      %p57 = scmp.ne.s32.totalorder %s48, %s49
      %p58 = scmp.eq.s32.totalorder %s22, 0
      %p59 = por %p57, %p58
      %p60 = scmp.ne.s32.totalorder %s48, %s49
      %p61 = scmp.eq.s32.totalorder %s23, 1
      %p62 = por %p60, %p61
      %p64 = scmp.ne.s32.totalorder %s49, %s63
      %p65 = scmp.eq.s32.totalorder %s23, 0
      %p66 = por %p64, %p65
      %s67 = ssub.s32 %s17, %s24
      %p68 = scmp.eq.s32.totalorder %s67, 0
      %s70 = sadd.s32 %s69, 1
      %s71 = scalar_select %p68, %s69, %s70
      %p74 = pneg %p68
      %p75 = scmp.eq.s32.totalorder %s17, 1
      %p76 = por %p74, %p75
      %p77 = scmp.ne.s32.totalorder %s69, %s72
      %p78 = scmp.eq.s32.totalorder %s17, 0
      %p79 = por %p77, %p78
      %p80 = scmp.ne.s32.totalorder %s69, %s72
      %p81 = scmp.eq.s32.totalorder %s22, 1
      %p82 = por %p80, %p81
      %p83 = scmp.ne.s32.totalorder %s72, %s73
      %p84 = scmp.eq.s32.totalorder %s22, 0
      %p85 = por %p83, %p84
      %p86 = scmp.ne.s32.totalorder %s72, %s73
      %p87 = scmp.eq.s32.totalorder %s23, 1
      %p88 = por %p86, %p87
      %p90 = scmp.ne.s32.totalorder %s73, %s89
      %p91 = scmp.eq.s32.totalorder %s23, 0
      %p92 = por %p90, %p91
      %s94 = sadd.s32 %s93, 1
      %p97 = scmp.eq.s32.totalorder %s17, 1
      %p98 = scmp.ne.s32.totalorder %s93, %s95
      %p99 = scmp.eq.s32.totalorder %s17, 0
      %p100 = por %p98, %p99
      %p101 = scmp.ne.s32.totalorder %s93, %s95
      %p102 = scmp.eq.s32.totalorder %s22, 1
      %p103 = por %p101, %p102
      %p104 = scmp.ne.s32.totalorder %s95, %s96
      %p105 = scmp.eq.s32.totalorder %s22, 0
      %p106 = por %p104, %p105
      %p107 = scmp.ne.s32.totalorder %s95, %s96
      %p108 = scmp.eq.s32.totalorder %s23, 1
      %p109 = por %p107, %p108
      %p111 = scmp.ne.s32.totalorder %s96, %s110
      %p112 = scmp.eq.s32.totalorder %s23, 0
      %p113 = por %p111, %p112
      %s115 = sadd.s32 %s114, 1
      %p118 = scmp.eq.s32.totalorder %s17, 1
      %p119 = scmp.ne.s32.totalorder %s114, %s116
      %p120 = scmp.eq.s32.totalorder %s17, 0
      %p121 = por %p119, %p120
      %p122 = scmp.ne.s32.totalorder %s114, %s116
      %p123 = scmp.eq.s32.totalorder %s22, 1
      %p124 = por %p122, %p123
      %p125 = scmp.ne.s32.totalorder %s116, %s117
      %p126 = scmp.eq.s32.totalorder %s22, 0
      %p127 = por %p125, %p126
      %p128 = scmp.ne.s32.totalorder %s116, %s117
      %p129 = scmp.eq.s32.totalorder %s23, 1
      %p130 = por %p128, %p129
      %p132 = scmp.ne.s32.totalorder %s117, %s131
      %p133 = scmp.eq.s32.totalorder %s23, 0
      %p134 = por %p132, %p133
      %s135 = ssub.s32 %s17, %s24
      %p136 = scmp.eq.s32.totalorder %s135, 0
      %s138 = sadd.s32 %s137, 1
      %s139 = scalar_select %p136, %s137, %s138
      %p142 = pneg %p136
      %p143 = scmp.eq.s32.totalorder %s17, 1
      %p144 = por %p142, %p143
      %p145 = scmp.ne.s32.totalorder %s137, %s140
      %p146 = scmp.eq.s32.totalorder %s17, 0
      %p147 = por %p145, %p146
      %p148 = scmp.ne.s32.totalorder %s137, %s140
      %p149 = scmp.eq.s32.totalorder %s22, 1
      %p150 = por %p148, %p149
      %p151 = scmp.ne.s32.totalorder %s140, %s141
      %p152 = scmp.eq.s32.totalorder %s22, 0
      %p153 = por %p151, %p152
      %p154 = scmp.ne.s32.totalorder %s140, %s141
      %p155 = scmp.eq.s32.totalorder %s23, 1
      %p156 = por %p154, %p155
      %p158 = scmp.ne.s32.totalorder %s141, %s157
      %p159 = scmp.eq.s32.totalorder %s23, 0
      %p160 = por %p158, %p159
      %s161 = ssub.s32 %s17, %s24
      %p162 = scmp.eq.s32.totalorder %s161, 0
      %s164 = sadd.s32 %s163, 1
      %s165 = scalar_select %p162, %s163, %s164
      %p168 = pneg %p162
      %p169 = scmp.eq.s32.totalorder %s17, 1
      %p170 = por %p168, %p169
      %p171 = scmp.ne.s32.totalorder %s163, %s166
      %p172 = scmp.eq.s32.totalorder %s17, 0
      %p173 = por %p171, %p172
      %p174 = scmp.ne.s32.totalorder %s163, %s166
      %p175 = scmp.eq.s32.totalorder %s22, 1
      %p176 = por %p174, %p175
      %p177 = scmp.ne.s32.totalorder %s166, %s167
      %p178 = scmp.eq.s32.totalorder %s22, 0
      %p179 = por %p177, %p178
      %p180 = scmp.ne.s32.totalorder %s166, %s167
      %p181 = scmp.eq.s32.totalorder %s23, 1
      %p182 = por %p180, %p181
      %p184 = scmp.ne.s32.totalorder %s167, %s183
      %p185 = scmp.eq.s32.totalorder %s23, 0
      %p186 = por %p184, %p185
      %p187 = scmp.le.s32.totalorder 1, %s17
      %p188 = scmp.lt.s32.totalorder %s17, 3
      %p189 = pnand %p187, %p188
      %p190 = pneg %p189
      // Predicated region
      $region9: #{tpu_custom_call.1} parent=5 // pred_check
        _
      $region10: #{tpu_custom_call.1} parent=5 // pred_check_branch
        %192 = sbr.rel (%p189) target = $region12
      $region11: #{tpu_custom_call.1} parent=5 // pred_region
        %s193 = ssub.s32 %s17, 1
        // Predicated region
        $region13: #{tpu_custom_call.1} parent=11 // pred_check
          %p194 = pneg %p38
        $region14: #{tpu_custom_call.1} parent=11 // pred_check_branch
          %196 = sbr.rel (%p194) target = $region16
        $region15: #{tpu_custom_call.1} parent=11 // pred_region
          _
        $region16: #{tpu_custom_call.1} parent=11 // pred_fallthru
          _
        // Predicated region
        $region17: #{tpu_custom_call.1} parent=11 // pred_check
          %p197 = pneg %p59
        $region18: #{tpu_custom_call.1} parent=11 // pred_check_branch
          %199 = sbr.rel (%p197) target = $region20
        $region19: #{tpu_custom_call.1} parent=11 // pred_region
          %s201 = ssub.s32 2048, 2048
          %202 = vsyncadd [#allocation3], %s201
          %s203 = sshll.u32 [#allocation2], 4
          %s204 = int_to_ptr.vmem [resolvable:$true] %s203
          %209 = dma.hbm_to_vmem [thread:$0]  %s1, 2048, %s204, [#allocation3], 128, 128, 8
        $region20: #{tpu_custom_call.1} parent=11 // pred_fallthru
          _
        // Predicated region
        $region21: #{tpu_custom_call.1} parent=11 // pred_check
          %p210 = pneg %p106
        $region22: #{tpu_custom_call.1} parent=11 // pred_check_branch
          %212 = sbr.rel (%p210) target = $region24
        $region23: #{tpu_custom_call.1} parent=11 // pred_region
          %s214 = ssub.s32 16, 16
          %215 = vsyncadd [#allocation6], %s214
          %s217 = sshll.u32 [#allocation5], 4
          %s218 = int_to_ptr.vmem [resolvable:$true] %s217
          %220 = dma.hbm_to_vmem [thread:$0]  %s3, 16, %s218, [#allocation6]
        $region24: #{tpu_custom_call.1} parent=11 // pred_fallthru
          _
        // Predicated region
        $region25: #{tpu_custom_call.1} parent=11 // pred_check
          %p221 = pneg %p127
        $region26: #{tpu_custom_call.1} parent=11 // pred_check_branch
          %223 = sbr.rel (%p221) target = $region28
        $region27: #{tpu_custom_call.1} parent=11 // pred_region
          %s225 = ssub.s32 16, 16
          %226 = vsyncadd [#allocation6], %s225
          %s228 = sshll.u32 [#allocation7], 4
          %s229 = int_to_ptr.vmem [resolvable:$true] %s228
          %231 = dma.hbm_to_vmem [thread:$0]  %s4, 16, %s229, [#allocation6]
        $region28: #{tpu_custom_call.1} parent=11 // pred_fallthru
          _
      $region12: #{tpu_custom_call.1} parent=5 // pred_fallthru
        _
      %p232 = scmp.lt.s32.totalorder %s17, 2
      // Predicated region
      $region29: #{tpu_custom_call.1} parent=5 // pred_check
        %p233 = pneg %p232
      $region30: #{tpu_custom_call.1} parent=5 // pred_check_branch
        %235 = sbr.rel (%p233) target = $region32
      $region31: #{tpu_custom_call.1} parent=5 // pred_region
        // Predicated region
        $region33: #{tpu_custom_call.1} parent=31 // pred_check
          %p236 = pneg %p79
        $region34: #{tpu_custom_call.1} parent=31 // pred_check_branch
          %238 = sbr.rel (%p236) target = $region36
        $region35: #{tpu_custom_call.1} parent=31 // pred_region
          %p239 = scmp.lt.s32.totalorder %s17, 1
          %s240 = scalar_select %p239, %s17, 1
          %s241 = smul.addr %s240, 8
          %s242 = scalar_lea.vmem %s2, %s241
        $region36: #{tpu_custom_call.1} parent=31 // pred_fallthru
          _
        // Predicated region
        $region37: #{tpu_custom_call.1} parent=31 // pred_check
          %p243 = pneg %p147
        $region38: #{tpu_custom_call.1} parent=31 // pred_check_branch
          %245 = sbr.rel (%p243) target = $region40
        $region39: #{tpu_custom_call.1} parent=31 // pred_region
          %p246 = scmp.lt.s32.totalorder %s17, 1
          %s247 = scalar_select %p246, %s17, 1
          %s248 = smul.addr %s247, 8
          %s249 = scalar_lea.vmem %s5, %s248
        $region40: #{tpu_custom_call.1} parent=31 // pred_fallthru
          _
      $region32: #{tpu_custom_call.1} parent=5 // pred_fallthru
        _
      %p250 = scmp.le.s32.totalorder 1, %s17
      %p251 = scmp.lt.s32.totalorder %s17, 3
      %p252 = pnand %p250, %p251
      %p253 = pneg %p252
      // Predicated region
      $region41: #{tpu_custom_call.1} parent=5 // pred_check
        _
      $region42: #{tpu_custom_call.1} parent=5 // pred_check_branch
        %255 = sbr.rel (%p252) target = $region44
      $region43: #{tpu_custom_call.1} parent=5 // pred_region
        %s256 = ssub.s32 %s17, 1
        // Predicated region
        $region45: #{tpu_custom_call.1} parent=43 // pred_check
          %p257 = pneg %p59
        $region46: #{tpu_custom_call.1} parent=43 // pred_check_branch
          %259 = sbr.rel (%p257) target = $region48
        $region47: #{tpu_custom_call.1} parent=43 // pred_region
          %260 = dma.done [#allocation3], 2048
        $region48: #{tpu_custom_call.1} parent=43 // pred_fallthru
          _
        // Predicated region
        $region49: #{tpu_custom_call.1} parent=43 // pred_check
          %p261 = pneg %p106
        $region50: #{tpu_custom_call.1} parent=43 // pred_check_branch
          %263 = sbr.rel (%p261) target = $region52
        $region51: #{tpu_custom_call.1} parent=43 // pred_region
          %264 = dma.done [#allocation6], 16
        $region52: #{tpu_custom_call.1} parent=43 // pred_fallthru
          _
        // Predicated region
        $region53: #{tpu_custom_call.1} parent=43 // pred_check
          %p265 = pneg %p127
        $region54: #{tpu_custom_call.1} parent=43 // pred_check_branch
          %267 = sbr.rel (%p265) target = $region56
        $region55: #{tpu_custom_call.1} parent=43 // pred_region
          %268 = dma.done [#allocation6], 16
        $region56: #{tpu_custom_call.1} parent=43 // pred_fallthru
          _
        %p269 = pneg %p38
        %p270 = pneg %p35
        %p271 = pneg %p59
        %p272 = pneg %p56
        %p273 = scmp.lt.s32.totalorder %s22, 1
        %s274 = scalar_select %p273, %s22, 1
        %s275 = smul.addr %s274, 8
        %s276 = scalar_lea.vmem %s2, %s275
        %p277 = pneg %p85
        %p278 = pneg %p82
        %p279 = pneg %p106
        %p280 = pneg %p103
        %p281 = pneg %p127
        %p282 = pneg %p124
        %p283 = scmp.lt.s32.totalorder %s22, 1
        %s284 = scalar_select %p283, %s22, 1
        %s285 = smul.addr %s284, 8
        %s286 = scalar_lea.vmem %s5, %s285
        %p287 = pneg %p153
        %p288 = pneg %p150
        %p289 = pneg %p179
        %p290 = pneg %p176
        %s291 = sand.u32 %s166, 1
        %s292 = scalar_lea.sflag [#allocation4], %s291
        %s293 = sand.u32 %s166, 1
        %s294 = smul.addr %s293, 8
        %s295 = scalar_lea.vmem [#allocation8], %s294
        %p296 = scmp.lt.s32.totalorder %s22, 1
        %s297 = scalar_select %p296, %s22, 1
        %s298 = smul.addr %s297, 8
        %s299 = scalar_lea.vmem %s2, %s298
        %p300 = scmp.lt.s32.totalorder %s22, 1
        %s301 = scalar_select %p300, %s22, 1
        %s302 = smul.addr %s301, 8
        %s303 = scalar_lea.vmem %s5, %s302
        %v304 = vld [vmem:[%s0] sm:$0xff]
        %v305 = vld [vmem:[%s0 + $0x8] sm:$0xff]
        %v306 = vld [vmem:[#allocation2] sm:$0xff]
        %v307 = vld [vmem:[#allocation2 + $0x8] sm:$0xff]
        %v308 = vld [vmem:[#allocation2 + $0x10] sm:$0xff]
        %v309 = vld [vmem:[#allocation2 + $0x18] sm:$0xff]
        %v310 = vld [vmem:[#allocation2 + $0x20] sm:$0xff]
        %v311 = vld [vmem:[#allocation2 + $0x28] sm:$0xff]
        %v312 = vld [vmem:[#allocation2 + $0x30] sm:$0xff]
        %v313 = vld [vmem:[#allocation2 + $0x38] sm:$0xff]
        %v314 = vld [vmem:[#allocation2 + $0x40] sm:$0xff]
        %v315 = vld [vmem:[#allocation2 + $0x48] sm:$0xff]
        %v316 = vld [vmem:[#allocation2 + $0x50] sm:$0xff]
        %v317 = vld [vmem:[#allocation2 + $0x58] sm:$0xff]
        %v318 = vld [vmem:[#allocation2 + $0x60] sm:$0xff]
        %v319 = vld [vmem:[#allocation2 + $0x68] sm:$0xff]
        %v320 = vld [vmem:[#allocation2 + $0x70] sm:$0xff]
        %v321 = vld [vmem:[#allocation2 + $0x78] sm:$0xff]
        %322 = vmatprep.subr.mxu0 0.0
        %323 = vmatpush1.msra.mxu0 %v306
        %324 = vmatprep.subr.mxu0 0.0
        %325 = vmatpush1.msra.mxu0 %v307
        %326 = vmatprep.subr.mxu0 0.0
        %327 = vmatpush1.msra.mxu0 %v308
        %328 = vmatprep.subr.mxu0 0.0
        %329 = vmatpush1.msra.mxu0 %v309
        %330 = vmatprep.subr.mxu0 0.0
        %331 = vmatpush1.msra.mxu0 %v310
        %332 = vmatprep.subr.mxu0 0.0
        %333 = vmatpush1.msra.mxu0 %v311
        %334 = vmatprep.subr.mxu0 0.0
        %335 = vmatpush1.msra.mxu0 %v312
        %336 = vmatprep.subr.mxu0 0.0
        %337 = vmatpush1.msra.mxu0 %v313
        %338 = vmatprep.subr.mxu0 0.0
        %339 = vmatpush1.msra.mxu0 %v314
        %340 = vmatprep.subr.mxu0 0.0
        %341 = vmatpush1.msra.mxu0 %v315
        %342 = vmatprep.subr.mxu0 0.0
        %343 = vmatpush1.msra.mxu0 %v316
        %344 = vmatprep.subr.mxu0 0.0
        %345 = vmatpush1.msra.mxu0 %v317
        %346 = vmatprep.subr.mxu0 0.0
        %347 = vmatpush1.msra.mxu0 %v318
        %348 = vmatprep.subr.mxu0 0.0
        %349 = vmatpush1.msra.mxu0 %v319
        %350 = vmatprep.subr.mxu0 0.0
        %351 = vmatpush1.msra.mxu0 %v320
        %352 = vmatprep.subr.mxu0 0.0
        %353 = vmatpush1.msra.mxu0 %v321
        %354 = vmatprep.subr.mxu0 0.0
        %355 = vmatpush1.msra.mxu0 0.0
        %356 = vmatprep.subr.mxu0 0.0
        %357 = vmatpush1.msra.mxu0 0.0
        %358 = vmatprep.subr.mxu0 0.0
        %359 = vmatpush1.msra.mxu0 0.0
        %360 = vmatprep.subr.mxu0 0.0
        %361 = vmatpush1.msra.mxu0 0.0
        %362 = vmatprep.subr.mxu0 0.0
        %363 = vmatpush1.msra.mxu0 0.0
        %364 = vmatprep.subr.mxu0 0.0
        %365 = vmatpush1.msra.mxu0 0.0
        %366 = vmatprep.subr.mxu0 0.0
        %367 = vmatpush1.msra.mxu0 0.0
        %368 = vmatprep.subr.mxu0 0.0
        %369 = vmatpush1.msra.mxu0 0.0
        %370 = vmatprep.subr.mxu0 0.0
        %371 = vmatpush1.msra.mxu0 0.0
        %372 = vmatprep.subr.mxu0 0.0
        %373 = vmatpush1.msra.mxu0 0.0
        %374 = vmatprep.subr.mxu0 0.0
        %375 = vmatpush1.msra.mxu0 0.0
        %376 = vmatprep.subr.mxu0 0.0
        %377 = vmatpush1.msra.mxu0 0.0
        %378 = vmatprep.subr.mxu0 0.0
        %379 = vmatpush1.msra.mxu0 0.0
        %380 = vmatprep.subr.mxu0 0.0
        %381 = vmatpush1.msra.mxu0 0.0
        %382 = vmatprep.subr.mxu0 0.0
        %383 = vmatpush1.msra.mxu0 0.0
        %384 = vmatprep.subr.mxu0 0.0
        %385 = vmatpush1.msra.mxu0 0.0
        %386 = vmatprep.mubr.f32.mxu0 0.0
        %387 = vmatmul.mubr.f32.gmra.mrb[0].mxu0 %v304
        %v388 = vpop.f32.mrb[0].mxu0
        %v389 = vadd.f32 0.0, %v388
        %v390 = vpop.f32.mrb[0].mxu0
        %391 = vmatprep.mubr.f32.mxu0 0.0
        %392 = vmatmul.mubr.f32.gmra.mrb[0].mxu0 %v305
        %v393 = vpop.f32.mrb[0].mxu0
        %v394 = vadd.f32 0.0, %v393
        %v395 = vpop.f32.mrb[0].mxu0
        %396 = vdwg.mxu0
        %v397 = vld [vmem:[%s299] sm:$0xff]
        %v398 = vld [vmem:[#allocation5] sm:$0x1]
        %400 = vset.pattern.permute.xlu0 0
        %401 = vperm.xlu0 %400, %v397
        %v402 = vpop.permute.xlu0 %401
        %v405 = vlaneseq
        %v406 = vshrl.u32 %v405, 7
        %v407 = vsub.s32 0, %v406
        %v408 = vrot.slane %v398, %v407
        %v410 = vadd.f32 %v402, %v408
        %v411 = vld [vmem:[%s303] sm:$0xff]
        %v412 = vadd.f32 %v410, %v411
        %vm413 = vcmp.gt.f32.partialorder %v412, 0.0
        %v414 = vmul.f32 %v412, 0.2
        %v415 = vsel %vm413, %v412, %v414
        %vm416 = vcmask 130048
        %v417 = vsel %vm416, %v415, -inf
        %418 = vmax.xlane.f32.xlu0 %v417
        %v419 = vpop.xlane.xlu0 %418
        %v420 = vsub.f32 %v415, %v419
        %v421 = vmul.f32 %v420, 1.442695
        %v422 = vpow.pop %v421
        %v423 = vsel %vm416, %v422, 0.0
        %424 = vadd.xlane.f32.xlu0 %v423
        %v425 = vpop.xlane.xlu0 %424
        %v426 = vrcp.pop %v425
        %v427 = vmul.f32 %v422, %v426
        %v428 = vld [vmem:[#allocation7] sm:$0x1]
        %v430 = vlaneseq
        %v431 = vshrl.u32 %v430, 7
        %v432 = vsub.s32 0, %v431
        %v433 = vrot.slane %v428, %v432
        %v436 = vsel %vm416, %v427, 0
        %438 = vmatprep.subr.mxu0 0.0
        %439 = vmatpush1.msra.mxu0 %v389
        %440 = vmatprep.subr.mxu0 0.0
        %441 = vmatpush1.msra.mxu0 %v394
        %442 = vmatprep.subr.mxu0 0.0
        %443 = vmatpush1.msra.mxu0 0.0
        %444 = vmatprep.subr.mxu0 0.0
        %445 = vmatpush1.msra.mxu0 0.0
        %446 = vmatprep.subr.mxu0 0.0
        %447 = vmatpush1.msra.mxu0 0.0
        %448 = vmatprep.subr.mxu0 0.0
        %449 = vmatpush1.msra.mxu0 0.0
        %450 = vmatprep.subr.mxu0 0.0
        %451 = vmatpush1.msra.mxu0 0.0
        %452 = vmatprep.subr.mxu0 0.0
        %453 = vmatpush1.msra.mxu0 0.0
        %454 = vmatprep.subr.mxu0 0.0
        %455 = vmatpush1.msra.mxu0 0.0
        %456 = vmatprep.subr.mxu0 0.0
        %457 = vmatpush1.msra.mxu0 0.0
        %458 = vmatprep.subr.mxu0 0.0
        %459 = vmatpush1.msra.mxu0 0.0
        %460 = vmatprep.subr.mxu0 0.0
        %461 = vmatpush1.msra.mxu0 0.0
        %462 = vmatprep.subr.mxu0 0.0
        %463 = vmatpush1.msra.mxu0 0.0
        %464 = vmatprep.subr.mxu0 0.0
        %465 = vmatpush1.msra.mxu0 0.0
        %466 = vmatprep.subr.mxu0 0.0
        %467 = vmatpush1.msra.mxu0 0.0
        %468 = vmatprep.subr.mxu0 0.0
        %469 = vmatpush1.msra.mxu0 0.0
        %470 = vmatprep.subr.mxu0 0.0
        %471 = vmatpush1.msra.mxu0 0.0
        %472 = vmatprep.subr.mxu0 0.0
        %473 = vmatpush1.msra.mxu0 0.0
        %474 = vmatprep.subr.mxu0 0.0
        %475 = vmatpush1.msra.mxu0 0.0
        %476 = vmatprep.subr.mxu0 0.0
        %477 = vmatpush1.msra.mxu0 0.0
        %478 = vmatprep.subr.mxu0 0.0
        %479 = vmatpush1.msra.mxu0 0.0
        %480 = vmatprep.subr.mxu0 0.0
        %481 = vmatpush1.msra.mxu0 0.0
        %482 = vmatprep.subr.mxu0 0.0
        %483 = vmatpush1.msra.mxu0 0.0
        %484 = vmatprep.subr.mxu0 0.0
        %485 = vmatpush1.msra.mxu0 0.0
        %486 = vmatprep.subr.mxu0 0.0
        %487 = vmatpush1.msra.mxu0 0.0
        %488 = vmatprep.subr.mxu0 0.0
        %489 = vmatpush1.msra.mxu0 0.0
        %490 = vmatprep.subr.mxu0 0.0
        %491 = vmatpush1.msra.mxu0 0.0
        %492 = vmatprep.subr.mxu0 0.0
        %493 = vmatpush1.msra.mxu0 0.0
        %494 = vmatprep.subr.mxu0 0.0
        %495 = vmatpush1.msra.mxu0 0.0
        %496 = vmatprep.subr.mxu0 0.0
        %497 = vmatpush1.msra.mxu0 0.0
        %498 = vmatprep.subr.mxu0 0.0
        %499 = vmatpush1.msra.mxu0 0.0
        %500 = vmatprep.subr.mxu0 0.0
        %501 = vmatpush1.msra.mxu0 0.0
        %502 = vmatprep.mubr.f32.mxu0 0.0
        %503 = vmatmul.mubr.f32.gmra.mrb[0].mxu0 %v436
        %v504 = vpop.f32.mrb[0].mxu0
        %v505 = vadd.f32 %v433, %v504
        %v506 = vpop.f32.mrb[0].mxu0
        %507 = vdwg.mxu0
        %v508 = vmax.f32 %v505, 0.0
        %509 = vst [vmem:[%s295] sm:$0xff] %v508
        %s510 = sand.u32 %s166, 1
        %s511 = scalar_lea.sflag [#allocation4], %s510
        %s512 = sand.u32 %s166, 1
        %s513 = smul.addr %s512, 8
        %s514 = scalar_lea.vmem [#allocation8], %s513
        // Predicated region
        $region57: #{tpu_custom_call.1} parent=43 // pred_check
          %p515 = pneg %p176
        $region58: #{tpu_custom_call.1} parent=43 // pred_check_branch
          %517 = sbr.rel (%p515) target = $region60
        $region59: #{tpu_custom_call.1} parent=43 // pred_region
          %s519 = ssub.s32 128, 128
          %520 = vsyncadd %s511, %s519
          %s521 = smul.addr %s22, 128
          %s522 = scalar_lea.hbm %s6, %s521
          %s524 = sshll.u32 %s514, 4
          %s525 = int_to_ptr.vmem [resolvable:$true] %s524
          %527 = dma.vmem_to_hbm [thread:$0]  %s525, 128, %s522, %s511
        $region60: #{tpu_custom_call.1} parent=43 // pred_fallthru
          _
      $region44: #{tpu_custom_call.1} parent=5 // pred_fallthru
        _
      %p528 = scmp.le.s32.totalorder 2, %s17
      // Predicated region
      $region61: #{tpu_custom_call.1} parent=5 // pred_check
        %p529 = pneg %p528
      $region62: #{tpu_custom_call.1} parent=5 // pred_check_branch
        %531 = sbr.rel (%p529) target = $region64
      $region63: #{tpu_custom_call.1} parent=5 // pred_region
        %s532 = ssub.s32 %s17, 2
        // Predicated region
        $region65: #{tpu_custom_call.1} parent=63 // pred_check
          %p533 = pneg %p182
        $region66: #{tpu_custom_call.1} parent=63 // pred_check_branch
          %535 = sbr.rel (%p533) target = $region68
        $region67: #{tpu_custom_call.1} parent=63 // pred_region
          %s536 = sand.u32 %s167, 1
          %s537 = scalar_lea.sflag [#allocation4], %s536
          %s538 = sand.u32 %s167, 1
          %s539 = smul.addr %s538, 8
          %s540 = scalar_lea.vmem [#allocation8], %s539
          %541 = dma.done %s537, 128
        $region68: #{tpu_custom_call.1} parent=63 // pred_fallthru
          _
      $region64: #{tpu_custom_call.1} parent=5 // pred_fallthru
        _
    $region6: #{tpu_custom_call.1} parent=1 // loop_footer
      %s21 = sadd.s32 1, %s17
    $region7: #{tpu_custom_call.1} parent=1 // loop_footer_branch
      %16 = sbr.rel target = $region3
    $region8: #{tpu_custom_call.1} parent=1 // loop_exit
      _
    %542 = vsyncpa [#allocation3], 1
    %s543 = scalar_lea.sflag [#allocation3], 1
    %544 = vsyncpa %s543, 1
    %545 = vsyncpa [#allocation6], 1
    %546 = vsyncpa [#allocation4], 1
    %s547 = scalar_lea.sflag [#allocation4], 1
    %548 = vsyncpa %s547, 1

</llo_original>
